<compile_context>
chip_gen: v5e
topology: v5e:2x2
jax: 0.10.0
libtpu: 0.0.40
codegen_flags: <defaults>
</compile_context>

<pallas_src>
import functools

import jax
import jax.numpy as jnp
from jax.experimental import pallas as pl
from jax.experimental.pallas import tpu as pltpu


def _fused_model_kernel(x_ref, w_ref, o_ref, col_ref, *, width):
    """Whole 3-block forward for one image, fully VMEM-resident.

    x_ref  : (1, C, H*W)      channel-major input (H*W on the lane axis)
    w_ref  : (3, 2C, 9C)      per-block fused [aux ; main] weights, columns
                              ordered tap-major then input-channel
    o_ref  : (3, 1, 2C, H*W)  per-block fused conv+ReLU outputs
    col_ref: (9C, H*W)        im2col staging buffer (VMEM scratch)
    """
    C = x_ref.shape[1]
    HW = x_ref.shape[2]
    W = width

    # Zero the im2col buffer once per grid step: the per-tap halo regions are
    # never stored (they are the 'same'-padding zeros) and the interior is
    # fully rewritten for every block.
    col_ref[...] = jnp.zeros_like(col_ref)

    # Column-validity masks for the horizontally shifted taps (built once,
    # hoisted out of the tap/block loops).
    col_idx = jax.lax.broadcasted_iota(jnp.int32, (1, HW), 1) % W
    mask_l = (col_idx != 0).astype(jnp.float32)       # source column c-1 valid
    mask_r = (col_idx != W - 1).astype(jnp.float32)   # source column c+1 valid

    def block(x_cur, blk):
        # Build im2col: row (tap*C + cin) holds input channel `cin` shifted by
        # tap (dh, dw).  Vertical shifts are realized by cropping the flat
        # window; horizontal shifts additionally apply the edge masks.
        for kh in range(3):
            dh = kh - 1
            for kw in range(3):
                dw = kw - 1
                tap = 3 * kh + kw
                s = dh * W + dw
                d0 = max(0, -s)
                d1 = min(HW, HW - s)
                src = x_cur[:, d0 + s:d1 + s]
                if dw == -1:
                    src = src * mask_l[:, d0:d1]
                elif dw == 1:
                    src = src * mask_r[:, d0:d1]
                col_ref[tap * C:(tap + 1) * C, d0:d1] = src
        # One fat MXU contraction per block: (2C, 9C) @ (9C, H*W) -> (2C, H*W).
        y = jnp.maximum(
            jnp.dot(w_ref[blk], col_ref[...],
                    preferred_element_type=jnp.float32),
            0.0)
        o_ref[blk, 0] = y          # early, lane-dense store ([aux ; main])
        return y[:C, :]            # chain the next block through the aux branch

    x_aux = block(x_ref[0], 0)
    x_aux = block(x_aux, 1)
    block(x_aux, 2)


def _pack_weights(params):
    """Fused per-block weights: (3, 2C, 9C), rows = [aux ; main] output chans,
    columns ordered (tap = 3*kh + kw)-major then input channel."""

    def to_mat(w):  # w: (3, 3, Cin, Cout) HWIO
        c_in, c_out = w.shape[2], w.shape[3]
        return jnp.transpose(w, (3, 0, 1, 2)).reshape(c_out, 9 * c_in)

    blocks = []
    for main, aux in (("w0", "w0a"), ("w1", "w1a"), ("w2", "w2a")):
        blocks.append(jnp.concatenate(
            [to_mat(params[aux]), to_mat(params[main])], axis=0))  # (2C, 9C)
    return jnp.stack(blocks, axis=0)                               # (3, 2C, 9C)


def model_forward(x1, params):
    N, C, H, W = x1.shape
    HW = H * W
    C2 = 2 * C
    x = x1.reshape(N, C, HW)        # NCHW is row-major: pure view, no transpose
    w = _pack_weights(params)

    y = pl.pallas_call(
        functools.partial(_fused_model_kernel, width=W),
        out_shape=jax.ShapeDtypeStruct((3, N, C2, HW), jnp.float32),
        grid_spec=pltpu.PrefetchScalarGridSpec(
            num_scalar_prefetch=0,
            grid=(N,),
            in_specs=[
                pl.BlockSpec((1, C, HW), lambda n: (n, 0, 0)),
                pl.BlockSpec((3, C2, 9 * C), lambda n: (0, 0, 0)),
            ],
            out_specs=pl.BlockSpec((3, 1, C2, HW), lambda n: (0, n, 0, 0)),
            scratch_shapes=[pltpu.VMEM((9 * C, HW), jnp.float32)],
        ),
        compiler_params=pltpu.CompilerParams(
            dimension_semantics=("parallel",)),
    )(x, w)

    y = y.reshape(3, N, C2, H, W)       # already NCHW per block: no transposes
    v_main = y[:, :, C:]                # (3, N, C, H, W) = v1, v2, v3
    v3a = y[2, :, :C]                   # (N, C, H, W)
    # torch.cat of unsqueezed tensors along dim 0 == stack on a new leading axis
    return jnp.concatenate([v_main, v3a[None]], axis=0)   # (4, N, C, H, W)


def init_params(key, c):
    keys = jax.random.split(key, 6)
    names = ["w0", "w0a", "w1", "w1a", "w2", "w2a"]
    scale = 1.0 / (3 * 3 * c) ** 0.5                    # kaiming-ish fan-in scale
    return {n: scale * jax.random.normal(k, (3, 3, c, c), jnp.float32)
            for n, k in zip(names, keys)}


# ---- plain-JAX reference (for a numerical sanity check only) ----------------
def _ref_conv(x, w):
    return jax.lax.conv_general_dilated(
        x, w, window_strides=(1, 1), padding="SAME",
        dimension_numbers=("NCHW", "HWIO", "NCHW"),
        precision=jax.lax.Precision.HIGHEST)


def _ref_forward(x, params):
    def blk(xin, wm, wa):
        return (jnp.maximum(_ref_conv(xin, wm), 0.0),
                jnp.maximum(_ref_conv(xin, wa), 0.0))
    v1, v1a = blk(x, params["w0"], params["w0a"])
    v2, v2a = blk(v1a, params["w1"], params["w1a"])
    v3, v3a = blk(v2a, params["w2"], params["w2a"])
    return jnp.stack([v1, v2, v3, v3a], axis=0)


if __name__ == "__main__":
    key = jax.random.PRNGKey(0)
    k_x, k_p = jax.random.split(key)

    N, C, H, W = 2, 4, 16, 16
    x1 = jax.random.normal(k_x, (N, C, H, W), jnp.float32)
    params = init_params(k_p, C)

    out = jax.jit(model_forward)(x1, params)
    out = jax.block_until_ready(out)

    assert out.shape == (4, N, C, H, W), out.shape
    assert out.dtype == jnp.float32

    ref = jax.block_until_ready(_ref_forward(x1, params))
    err = float(jnp.max(jnp.abs(out - ref)))
    assert err < 1e-3, f"max abs error vs reference: {err}"

    print("KERNEL_OK")
</pallas_src>

<mosaic_0001>
module attributes {stable_mosaic.version = 11 : i64} {
  func.func @_fused_model_kernel(%arg0: i32, %arg1: memref<1x4x256xf32, #tpu.memory_space<vmem>>, %arg2: memref<3x8x36xf32, #tpu.memory_space<vmem>>, %arg3: memref<3x1x8x256xf32, #tpu.memory_space<vmem>>, %arg4: memref<36x256xf32, #tpu.memory_space<vmem>>) attributes {dimension_semantics = [#tpu.dimension_semantics<parallel>], iteration_bounds = array<i64: 2>, scalar_prefetch = 0 : i64, scratch_operands = 1 : i64, tpu.core_type = #tpu.core_type<tc>, window_params = [{transform_indices = @transform_0, window_bounds = array<i64: 1, 4, 256>}, {pipeline_mode = #tpu.pipeline_mode<synchronous>, transform_indices = @transform_1, window_bounds = array<i64: 3, 8, 36>}, {transform_indices = @transform_2, window_bounds = array<i64: 3, 1, 8, 256>}]} {
    %cst = arith.constant 0.000000e+00 : f32
    %0 = vector.broadcast %cst : f32 to vector<36x256xf32>
    %c0 = arith.constant 0 : index
    %c0_0 = arith.constant 0 : index
    %1 = vector.load %arg4[%c0, %c0_0] : memref<36x256xf32, #tpu.memory_space<vmem>>, vector<36x256xf32>
    tpu.vector_store %arg4[%c0, %c0_0], %0 {strides = array<i32>} : memref<36x256xf32, #tpu.memory_space<vmem>>, vector<36x256xf32>,
    %2 = tpu.iota {dimensions = array<i32: 1>} : vector<1x256xi32>
    %c16_i32 = arith.constant 16 : i32
    %c0_i32 = arith.constant 0 : i32
    %3 = arith.cmpi eq, %c16_i32, %c0_i32 : i32
    %c1_i32 = arith.constant 1 : i32
    %4 = arith.select %3, %c1_i32, %c16_i32 : i32
    %5 = vector.broadcast %4 : i32 to vector<1x256xi32>
    %6 = arith.remsi %2, %5 : vector<1x256xi32>
    %c0_i32_1 = arith.constant 0 : i32
    %7 = vector.broadcast %c0_i32_1 : i32 to vector<1x256xi32>
    %8 = arith.cmpi ne, %6, %7 : vector<1x256xi32>
    %c0_i32_2 = arith.constant 0 : i32
    %9 = vector.broadcast %c0_i32_2 : i32 to vector<1x256xi32>
    %10 = arith.cmpi slt, %6, %9 : vector<1x256xi32>
    %c0_i32_3 = arith.constant 0 : i32
    %11 = arith.cmpi slt, %4, %c0_i32_3 : i32
    %12 = vector.broadcast %11 : i1 to vector<1x256xi1>
    %13 = vector.broadcast %12 : vector<1x256xi1> to vector<1x256xi1>
    %14 = arith.xori %10, %13 : vector<1x256xi1>
    %15 = arith.andi %14, %8 : vector<1x256xi1>
    %16 = vector.broadcast %4 : i32 to vector<1x256xi32>
    %17 = arith.addi %6, %16 : vector<1x256xi32>
    %18 = arith.select %15, %17, %6 : vector<1x256xi1>, vector<1x256xi32>
    %c0_i32_4 = arith.constant 0 : i32
    %19 = vector.broadcast %c0_i32_4 : i32 to vector<1x256xi32>
    %20 = arith.cmpi ne, %18, %19 : vector<1x256xi32>
    %21 = arith.extui %20 : vector<1x256xi1> to vector<1x256xi32>
    %22 = arith.sitofp %21 : vector<1x256xi32> to vector<1x256xf32>
    %c15_i32 = arith.constant 15 : i32
    %23 = vector.broadcast %c15_i32 : i32 to vector<1x256xi32>
    %24 = arith.cmpi ne, %18, %23 : vector<1x256xi32>
    %25 = arith.extui %24 : vector<1x256xi1> to vector<1x256xi32>
    %26 = arith.sitofp %25 : vector<1x256xi32> to vector<1x256xf32>
    %c0_5 = arith.constant 0 : index
    %c0_6 = arith.constant 0 : index
    %c0_7 = arith.constant 0 : index
    %27 = vector.load %arg1[%c0_5, %c0_6, %c0_7] : memref<1x4x256xf32, #tpu.memory_space<vmem>>, vector<1x4x256xf32>
    %28 = vector.shape_cast %27 : vector<1x4x256xf32> to vector<4x256xf32>
    %29 = vector.extract_strided_slice %28 {offsets = [0, 0], sizes = [4, 239], strides = [1, 1]} : vector<4x256xf32> to vector<4x239xf32>
    %30 = vector.extract_strided_slice %22 {offsets = [0, 17], sizes = [1, 239], strides = [1, 1]} : vector<1x256xf32> to vector<1x239xf32>
    %31 = vector.broadcast %30 : vector<1x239xf32> to vector<4x239xf32>
    %32 = arith.mulf %29, %31 : vector<4x239xf32>
    %c0_8 = arith.constant 0 : index
    %c17 = arith.constant 17 : index
    %33 = vector.load %arg4[%c0_8, %c17] : memref<36x256xf32, #tpu.memory_space<vmem>>, vector<4x239xf32>
    tpu.vector_store %arg4[%c0_8, %c17], %32 {strides = array<i32>} : memref<36x256xf32, #tpu.memory_space<vmem>>, vector<4x239xf32>,
    %34 = vector.extract_strided_slice %28 {offsets = [0, 0], sizes = [4, 240], strides = [1, 1]} : vector<4x256xf32> to vector<4x240xf32>
    %c4 = arith.constant 4 : index
    %c16 = arith.constant 16 : index
    %35 = vector.load %arg4[%c4, %c16] : memref<36x256xf32, #tpu.memory_space<vmem>>, vector<4x240xf32>
    tpu.vector_store %arg4[%c4, %c16], %34 {strides = array<i32>} : memref<36x256xf32, #tpu.memory_space<vmem>>, vector<4x240xf32>,
    %36 = vector.extract_strided_slice %28 {offsets = [0, 0], sizes = [4, 241], strides = [1, 1]} : vector<4x256xf32> to vector<4x241xf32>
    %37 = vector.extract_strided_slice %26 {offsets = [0, 15], sizes = [1, 241], strides = [1, 1]} : vector<1x256xf32> to vector<1x241xf32>
    %38 = vector.broadcast %37 : vector<1x241xf32> to vector<4x241xf32>
    %39 = arith.mulf %36, %38 : vector<4x241xf32>
    %c8 = arith.constant 8 : index
    %c15 = arith.constant 15 : index
    %40 = vector.load %arg4[%c8, %c15] : memref<36x256xf32, #tpu.memory_space<vmem>>, vector<4x241xf32>
    tpu.vector_store %arg4[%c8, %c15], %39 {strides = array<i32>} : memref<36x256xf32, #tpu.memory_space<vmem>>, vector<4x241xf32>,
    %41 = vector.extract_strided_slice %28 {offsets = [0, 0], sizes = [4, 255], strides = [1, 1]} : vector<4x256xf32> to vector<4x255xf32>
    %42 = vector.extract_strided_slice %22 {offsets = [0, 1], sizes = [1, 255], strides = [1, 1]} : vector<1x256xf32> to vector<1x255xf32>
    %43 = vector.broadcast %42 : vector<1x255xf32> to vector<4x255xf32>
    %44 = arith.mulf %41, %43 : vector<4x255xf32>
    %c12 = arith.constant 12 : index
    %c1 = arith.constant 1 : index
    %45 = vector.load %arg4[%c12, %c1] : memref<36x256xf32, #tpu.memory_space<vmem>>, vector<4x255xf32>
    tpu.vector_store %arg4[%c12, %c1], %44 {strides = array<i32>} : memref<36x256xf32, #tpu.memory_space<vmem>>, vector<4x255xf32>,
    %c16_9 = arith.constant 16 : index
    %c0_10 = arith.constant 0 : index
    %46 = vector.load %arg4[%c16_9, %c0_10] : memref<36x256xf32, #tpu.memory_space<vmem>>, vector<4x256xf32>
    tpu.vector_store %arg4[%c16_9, %c0_10], %28 {strides = array<i32>} : memref<36x256xf32, #tpu.memory_space<vmem>>, vector<4x256xf32>,
    %47 = vector.extract_strided_slice %28 {offsets = [0, 1], sizes = [4, 255], strides = [1, 1]} : vector<4x256xf32> to vector<4x255xf32>
    %48 = vector.extract_strided_slice %26 {offsets = [0, 0], sizes = [1, 255], strides = [1, 1]} : vector<1x256xf32> to vector<1x255xf32>
    %49 = vector.broadcast %48 : vector<1x255xf32> to vector<4x255xf32>
    %50 = arith.mulf %47, %49 : vector<4x255xf32>
    %c20 = arith.constant 20 : index
    %c0_11 = arith.constant 0 : index
    %51 = vector.load %arg4[%c20, %c0_11] : memref<36x256xf32, #tpu.memory_space<vmem>>, vector<4x255xf32>
    tpu.vector_store %arg4[%c20, %c0_11], %50 {strides = array<i32>} : memref<36x256xf32, #tpu.memory_space<vmem>>, vector<4x255xf32>,
    %52 = vector.extract_strided_slice %28 {offsets = [0, 15], sizes = [4, 241], strides = [1, 1]} : vector<4x256xf32> to vector<4x241xf32>
    %53 = vector.extract_strided_slice %22 {offsets = [0, 0], sizes = [1, 241], strides = [1, 1]} : vector<1x256xf32> to vector<1x241xf32>
    %54 = vector.broadcast %53 : vector<1x241xf32> to vector<4x241xf32>
    %55 = arith.mulf %52, %54 : vector<4x241xf32>
    %c24 = arith.constant 24 : index
    %c0_12 = arith.constant 0 : index
    %56 = vector.load %arg4[%c24, %c0_12] : memref<36x256xf32, #tpu.memory_space<vmem>>, vector<4x241xf32>
    tpu.vector_store %arg4[%c24, %c0_12], %55 {strides = array<i32>} : memref<36x256xf32, #tpu.memory_space<vmem>>, vector<4x241xf32>,
    %57 = vector.extract_strided_slice %28 {offsets = [0, 16], sizes = [4, 240], strides = [1, 1]} : vector<4x256xf32> to vector<4x240xf32>
    %c28 = arith.constant 28 : index
    %c0_13 = arith.constant 0 : index
    %58 = vector.load %arg4[%c28, %c0_13] : memref<36x256xf32, #tpu.memory_space<vmem>>, vector<4x240xf32>
    tpu.vector_store %arg4[%c28, %c0_13], %57 {strides = array<i32>} : memref<36x256xf32, #tpu.memory_space<vmem>>, vector<4x240xf32>,
    %59 = vector.extract_strided_slice %28 {offsets = [0, 17], sizes = [4, 239], strides = [1, 1]} : vector<4x256xf32> to vector<4x239xf32>
    %60 = vector.extract_strided_slice %26 {offsets = [0, 0], sizes = [1, 239], strides = [1, 1]} : vector<1x256xf32> to vector<1x239xf32>
    %61 = vector.broadcast %60 : vector<1x239xf32> to vector<4x239xf32>
    %62 = arith.mulf %59, %61 : vector<4x239xf32>
    %c32 = arith.constant 32 : index
    %c0_14 = arith.constant 0 : index
    %63 = vector.load %arg4[%c32, %c0_14] : memref<36x256xf32, #tpu.memory_space<vmem>>, vector<4x239xf32>
    tpu.vector_store %arg4[%c32, %c0_14], %62 {strides = array<i32>} : memref<36x256xf32, #tpu.memory_space<vmem>>, vector<4x239xf32>,
    %c0_15 = arith.constant 0 : index
    %c0_16 = arith.constant 0 : index
    %c0_17 = arith.constant 0 : index
    %64 = vector.load %arg2[%c0_15, %c0_16, %c0_17] : memref<3x8x36xf32, #tpu.memory_space<vmem>>, vector<1x8x36xf32>
    %65 = vector.shape_cast %64 : vector<1x8x36xf32> to vector<8x36xf32>
    %c0_18 = arith.constant 0 : index
    %c0_19 = arith.constant 0 : index
    %66 = vector.load %arg4[%c0_18, %c0_19] : memref<36x256xf32, #tpu.memory_space<vmem>>, vector<36x256xf32>
    %cst_20 = arith.constant dense<0.000000e+00> : vector<8x256xf32>
    %67 = tpu.matmul %65, %66, %cst_20 {dimension_numbers = #tpu.dot_dimension_numbers<[1], [0], [0], [1], [0, 0, 1, 1], [], []>} : vector<8x36xf32>, vector<36x256xf32>, vector<8x256xf32> -> vector<8x256xf32>
    %cst_21 = arith.constant 0.000000e+00 : f32
    %68 = vector.broadcast %cst_21 : f32 to vector<8x256xf32>
    %69 = arith.maximumf %67, %68 : vector<8x256xf32>
    %c0_22 = arith.constant 0 : index
    %c0_23 = arith.constant 0 : index
    %c0_24 = arith.constant 0 : index
    %c0_25 = arith.constant 0 : index
    %70 = vector.load %arg3[%c0_22, %c0_23, %c0_24, %c0_25] : memref<3x1x8x256xf32, #tpu.memory_space<vmem>>, vector<1x1x8x256xf32>
    %71 = vector.shape_cast %70 : vector<1x1x8x256xf32> to vector<8x256xf32>
    %72 = vector.shape_cast %69 : vector<8x256xf32> to vector<1x1x8x256xf32>
    tpu.vector_store %arg3[%c0_22, %c0_23, %c0_24, %c0_25], %72 {strides = array<i32>} : memref<3x1x8x256xf32, #tpu.memory_space<vmem>>, vector<1x1x8x256xf32>,
    %73 = vector.extract_strided_slice %69 {offsets = [0, 0], sizes = [4, 256], strides = [1, 1]} : vector<8x256xf32> to vector<4x256xf32>
    %74 = vector.extract_strided_slice %73 {offsets = [0, 0], sizes = [4, 239], strides = [1, 1]} : vector<4x256xf32> to vector<4x239xf32>
    %75 = vector.extract_strided_slice %22 {offsets = [0, 17], sizes = [1, 239], strides = [1, 1]} : vector<1x256xf32> to vector<1x239xf32>
    %76 = vector.broadcast %75 : vector<1x239xf32> to vector<4x239xf32>
    %77 = arith.mulf %74, %76 : vector<4x239xf32>
    %c0_26 = arith.constant 0 : index
    %c17_27 = arith.constant 17 : index
    %78 = vector.load %arg4[%c0_26, %c17_27] : memref<36x256xf32, #tpu.memory_space<vmem>>, vector<4x239xf32>
    tpu.vector_store %arg4[%c0_26, %c17_27], %77 {strides = array<i32>} : memref<36x256xf32, #tpu.memory_space<vmem>>, vector<4x239xf32>,
    %79 = vector.extract_strided_slice %73 {offsets = [0, 0], sizes = [4, 240], strides = [1, 1]} : vector<4x256xf32> to vector<4x240xf32>
    %c4_28 = arith.constant 4 : index
    %c16_29 = arith.constant 16 : index
    %80 = vector.load %arg4[%c4_28, %c16_29] : memref<36x256xf32, #tpu.memory_space<vmem>>, vector<4x240xf32>
    tpu.vector_store %arg4[%c4_28, %c16_29], %79 {strides = array<i32>} : memref<36x256xf32, #tpu.memory_space<vmem>>, vector<4x240xf32>,
    %81 = vector.extract_strided_slice %73 {offsets = [0, 0], sizes = [4, 241], strides = [1, 1]} : vector<4x256xf32> to vector<4x241xf32>
    %82 = vector.extract_strided_slice %26 {offsets = [0, 15], sizes = [1, 241], strides = [1, 1]} : vector<1x256xf32> to vector<1x241xf32>
    %83 = vector.broadcast %82 : vector<1x241xf32> to vector<4x241xf32>
    %84 = arith.mulf %81, %83 : vector<4x241xf32>
    %c8_30 = arith.constant 8 : index
    %c15_31 = arith.constant 15 : index
    %85 = vector.load %arg4[%c8_30, %c15_31] : memref<36x256xf32, #tpu.memory_space<vmem>>, vector<4x241xf32>
    tpu.vector_store %arg4[%c8_30, %c15_31], %84 {strides = array<i32>} : memref<36x256xf32, #tpu.memory_space<vmem>>, vector<4x241xf32>,
    %86 = vector.extract_strided_slice %73 {offsets = [0, 0], sizes = [4, 255], strides = [1, 1]} : vector<4x256xf32> to vector<4x255xf32>
    %87 = vector.extract_strided_slice %22 {offsets = [0, 1], sizes = [1, 255], strides = [1, 1]} : vector<1x256xf32> to vector<1x255xf32>
    %88 = vector.broadcast %87 : vector<1x255xf32> to vector<4x255xf32>
    %89 = arith.mulf %86, %88 : vector<4x255xf32>
    %c12_32 = arith.constant 12 : index
    %c1_33 = arith.constant 1 : index
    %90 = vector.load %arg4[%c12_32, %c1_33] : memref<36x256xf32, #tpu.memory_space<vmem>>, vector<4x255xf32>
    tpu.vector_store %arg4[%c12_32, %c1_33], %89 {strides = array<i32>} : memref<36x256xf32, #tpu.memory_space<vmem>>, vector<4x255xf32>,
    %c16_34 = arith.constant 16 : index
    %c0_35 = arith.constant 0 : index
    %91 = vector.load %arg4[%c16_34, %c0_35] : memref<36x256xf32, #tpu.memory_space<vmem>>, vector<4x256xf32>
    tpu.vector_store %arg4[%c16_34, %c0_35], %73 {strides = array<i32>} : memref<36x256xf32, #tpu.memory_space<vmem>>, vector<4x256xf32>,
    %92 = vector.extract_strided_slice %73 {offsets = [0, 1], sizes = [4, 255], strides = [1, 1]} : vector<4x256xf32> to vector<4x255xf32>
    %93 = vector.extract_strided_slice %26 {offsets = [0, 0], sizes = [1, 255], strides = [1, 1]} : vector<1x256xf32> to vector<1x255xf32>
    %94 = vector.broadcast %93 : vector<1x255xf32> to vector<4x255xf32>
    %95 = arith.mulf %92, %94 : vector<4x255xf32>
    %c20_36 = arith.constant 20 : index
    %c0_37 = arith.constant 0 : index
    %96 = vector.load %arg4[%c20_36, %c0_37] : memref<36x256xf32, #tpu.memory_space<vmem>>, vector<4x255xf32>
    tpu.vector_store %arg4[%c20_36, %c0_37], %95 {strides = array<i32>} : memref<36x256xf32, #tpu.memory_space<vmem>>, vector<4x255xf32>,
    %97 = vector.extract_strided_slice %73 {offsets = [0, 15], sizes = [4, 241], strides = [1, 1]} : vector<4x256xf32> to vector<4x241xf32>
    %98 = vector.extract_strided_slice %22 {offsets = [0, 0], sizes = [1, 241], strides = [1, 1]} : vector<1x256xf32> to vector<1x241xf32>
    %99 = vector.broadcast %98 : vector<1x241xf32> to vector<4x241xf32>
    %100 = arith.mulf %97, %99 : vector<4x241xf32>
    %c24_38 = arith.constant 24 : index
    %c0_39 = arith.constant 0 : index
    %101 = vector.load %arg4[%c24_38, %c0_39] : memref<36x256xf32, #tpu.memory_space<vmem>>, vector<4x241xf32>
    tpu.vector_store %arg4[%c24_38, %c0_39], %100 {strides = array<i32>} : memref<36x256xf32, #tpu.memory_space<vmem>>, vector<4x241xf32>,
    %102 = vector.extract_strided_slice %73 {offsets = [0, 16], sizes = [4, 240], strides = [1, 1]} : vector<4x256xf32> to vector<4x240xf32>
    %c28_40 = arith.constant 28 : index
    %c0_41 = arith.constant 0 : index
    %103 = vector.load %arg4[%c28_40, %c0_41] : memref<36x256xf32, #tpu.memory_space<vmem>>, vector<4x240xf32>
    tpu.vector_store %arg4[%c28_40, %c0_41], %102 {strides = array<i32>} : memref<36x256xf32, #tpu.memory_space<vmem>>, vector<4x240xf32>,
    %104 = vector.extract_strided_slice %73 {offsets = [0, 17], sizes = [4, 239], strides = [1, 1]} : vector<4x256xf32> to vector<4x239xf32>
    %105 = vector.extract_strided_slice %26 {offsets = [0, 0], sizes = [1, 239], strides = [1, 1]} : vector<1x256xf32> to vector<1x239xf32>
    %106 = vector.broadcast %105 : vector<1x239xf32> to vector<4x239xf32>
    %107 = arith.mulf %104, %106 : vector<4x239xf32>
    %c32_42 = arith.constant 32 : index
    %c0_43 = arith.constant 0 : index
    %108 = vector.load %arg4[%c32_42, %c0_43] : memref<36x256xf32, #tpu.memory_space<vmem>>, vector<4x239xf32>
    tpu.vector_store %arg4[%c32_42, %c0_43], %107 {strides = array<i32>} : memref<36x256xf32, #tpu.memory_space<vmem>>, vector<4x239xf32>,
    %c1_44 = arith.constant 1 : index
    %c0_45 = arith.constant 0 : index
    %c0_46 = arith.constant 0 : index
    %109 = vector.load %arg2[%c1_44, %c0_45, %c0_46] : memref<3x8x36xf32, #tpu.memory_space<vmem>>, vector<1x8x36xf32>
    %110 = vector.shape_cast %109 : vector<1x8x36xf32> to vector<8x36xf32>
    %c0_47 = arith.constant 0 : index
    %c0_48 = arith.constant 0 : index
    %111 = vector.load %arg4[%c0_47, %c0_48] : memref<36x256xf32, #tpu.memory_space<vmem>>, vector<36x256xf32>
    %cst_49 = arith.constant dense<0.000000e+00> : vector<8x256xf32>
    %112 = tpu.matmul %110, %111, %cst_49 {dimension_numbers = #tpu.dot_dimension_numbers<[1], [0], [0], [1], [0, 0, 1, 1], [], []>} : vector<8x36xf32>, vector<36x256xf32>, vector<8x256xf32> -> vector<8x256xf32>
    %cst_50 = arith.constant 0.000000e+00 : f32
    %113 = vector.broadcast %cst_50 : f32 to vector<8x256xf32>
    %114 = arith.maximumf %112, %113 : vector<8x256xf32>
    %c1_51 = arith.constant 1 : index
    %c0_52 = arith.constant 0 : index
    %c0_53 = arith.constant 0 : index
    %c0_54 = arith.constant 0 : index
    %115 = vector.load %arg3[%c1_51, %c0_52, %c0_53, %c0_54] : memref<3x1x8x256xf32, #tpu.memory_space<vmem>>, vector<1x1x8x256xf32>
    %116 = vector.shape_cast %115 : vector<1x1x8x256xf32> to vector<8x256xf32>
    %117 = vector.shape_cast %114 : vector<8x256xf32> to vector<1x1x8x256xf32>
    tpu.vector_store %arg3[%c1_51, %c0_52, %c0_53, %c0_54], %117 {strides = array<i32>} : memref<3x1x8x256xf32, #tpu.memory_space<vmem>>, vector<1x1x8x256xf32>,
    %118 = vector.extract_strided_slice %114 {offsets = [0, 0], sizes = [4, 256], strides = [1, 1]} : vector<8x256xf32> to vector<4x256xf32>
    %119 = vector.extract_strided_slice %118 {offsets = [0, 0], sizes = [4, 239], strides = [1, 1]} : vector<4x256xf32> to vector<4x239xf32>
    %120 = vector.extract_strided_slice %22 {offsets = [0, 17], sizes = [1, 239], strides = [1, 1]} : vector<1x256xf32> to vector<1x239xf32>
    %121 = vector.broadcast %120 : vector<1x239xf32> to vector<4x239xf32>
    %122 = arith.mulf %119, %121 : vector<4x239xf32>
    %c0_55 = arith.constant 0 : index
    %c17_56 = arith.constant 17 : index
    %123 = vector.load %arg4[%c0_55, %c17_56] : memref<36x256xf32, #tpu.memory_space<vmem>>, vector<4x239xf32>
    tpu.vector_store %arg4[%c0_55, %c17_56], %122 {strides = array<i32>} : memref<36x256xf32, #tpu.memory_space<vmem>>, vector<4x239xf32>,
    %124 = vector.extract_strided_slice %118 {offsets = [0, 0], sizes = [4, 240], strides = [1, 1]} : vector<4x256xf32> to vector<4x240xf32>
    %c4_57 = arith.constant 4 : index
    %c16_58 = arith.constant 16 : index
    %125 = vector.load %arg4[%c4_57, %c16_58] : memref<36x256xf32, #tpu.memory_space<vmem>>, vector<4x240xf32>
    tpu.vector_store %arg4[%c4_57, %c16_58], %124 {strides = array<i32>} : memref<36x256xf32, #tpu.memory_space<vmem>>, vector<4x240xf32>,
    %126 = vector.extract_strided_slice %118 {offsets = [0, 0], sizes = [4, 241], strides = [1, 1]} : vector<4x256xf32> to vector<4x241xf32>
    %127 = vector.extract_strided_slice %26 {offsets = [0, 15], sizes = [1, 241], strides = [1, 1]} : vector<1x256xf32> to vector<1x241xf32>
    %128 = vector.broadcast %127 : vector<1x241xf32> to vector<4x241xf32>
    %129 = arith.mulf %126, %128 : vector<4x241xf32>
    %c8_59 = arith.constant 8 : index
    %c15_60 = arith.constant 15 : index
    %130 = vector.load %arg4[%c8_59, %c15_60] : memref<36x256xf32, #tpu.memory_space<vmem>>, vector<4x241xf32>
    tpu.vector_store %arg4[%c8_59, %c15_60], %129 {strides = array<i32>} : memref<36x256xf32, #tpu.memory_space<vmem>>, vector<4x241xf32>,
    %131 = vector.extract_strided_slice %118 {offsets = [0, 0], sizes = [4, 255], strides = [1, 1]} : vector<4x256xf32> to vector<4x255xf32>
    %132 = vector.extract_strided_slice %22 {offsets = [0, 1], sizes = [1, 255], strides = [1, 1]} : vector<1x256xf32> to vector<1x255xf32>
    %133 = vector.broadcast %132 : vector<1x255xf32> to vector<4x255xf32>
    %134 = arith.mulf %131, %133 : vector<4x255xf32>
    %c12_61 = arith.constant 12 : index
    %c1_62 = arith.constant 1 : index
    %135 = vector.load %arg4[%c12_61, %c1_62] : memref<36x256xf32, #tpu.memory_space<vmem>>, vector<4x255xf32>
    tpu.vector_store %arg4[%c12_61, %c1_62], %134 {strides = array<i32>} : memref<36x256xf32, #tpu.memory_space<vmem>>, vector<4x255xf32>,
    %c16_63 = arith.constant 16 : index
    %c0_64 = arith.constant 0 : index
    %136 = vector.load %arg4[%c16_63, %c0_64] : memref<36x256xf32, #tpu.memory_space<vmem>>, vector<4x256xf32>
    tpu.vector_store %arg4[%c16_63, %c0_64], %118 {strides = array<i32>} : memref<36x256xf32, #tpu.memory_space<vmem>>, vector<4x256xf32>,
    %137 = vector.extract_strided_slice %118 {offsets = [0, 1], sizes = [4, 255], strides = [1, 1]} : vector<4x256xf32> to vector<4x255xf32>
    %138 = vector.extract_strided_slice %26 {offsets = [0, 0], sizes = [1, 255], strides = [1, 1]} : vector<1x256xf32> to vector<1x255xf32>
    %139 = vector.broadcast %138 : vector<1x255xf32> to vector<4x255xf32>
    %140 = arith.mulf %137, %139 : vector<4x255xf32>
    %c20_65 = arith.constant 20 : index
    %c0_66 = arith.constant 0 : index
    %141 = vector.load %arg4[%c20_65, %c0_66] : memref<36x256xf32, #tpu.memory_space<vmem>>, vector<4x255xf32>
    tpu.vector_store %arg4[%c20_65, %c0_66], %140 {strides = array<i32>} : memref<36x256xf32, #tpu.memory_space<vmem>>, vector<4x255xf32>,
    %142 = vector.extract_strided_slice %118 {offsets = [0, 15], sizes = [4, 241], strides = [1, 1]} : vector<4x256xf32> to vector<4x241xf32>
    %143 = vector.extract_strided_slice %22 {offsets = [0, 0], sizes = [1, 241], strides = [1, 1]} : vector<1x256xf32> to vector<1x241xf32>
    %144 = vector.broadcast %143 : vector<1x241xf32> to vector<4x241xf32>
    %145 = arith.mulf %142, %144 : vector<4x241xf32>
    %c24_67 = arith.constant 24 : index
    %c0_68 = arith.constant 0 : index
    %146 = vector.load %arg4[%c24_67, %c0_68] : memref<36x256xf32, #tpu.memory_space<vmem>>, vector<4x241xf32>
    tpu.vector_store %arg4[%c24_67, %c0_68], %145 {strides = array<i32>} : memref<36x256xf32, #tpu.memory_space<vmem>>, vector<4x241xf32>,
    %147 = vector.extract_strided_slice %118 {offsets = [0, 16], sizes = [4, 240], strides = [1, 1]} : vector<4x256xf32> to vector<4x240xf32>
    %c28_69 = arith.constant 28 : index
    %c0_70 = arith.constant 0 : index
    %148 = vector.load %arg4[%c28_69, %c0_70] : memref<36x256xf32, #tpu.memory_space<vmem>>, vector<4x240xf32>
    tpu.vector_store %arg4[%c28_69, %c0_70], %147 {strides = array<i32>} : memref<36x256xf32, #tpu.memory_space<vmem>>, vector<4x240xf32>,
    %149 = vector.extract_strided_slice %118 {offsets = [0, 17], sizes = [4, 239], strides = [1, 1]} : vector<4x256xf32> to vector<4x239xf32>
    %150 = vector.extract_strided_slice %26 {offsets = [0, 0], sizes = [1, 239], strides = [1, 1]} : vector<1x256xf32> to vector<1x239xf32>
    %151 = vector.broadcast %150 : vector<1x239xf32> to vector<4x239xf32>
    %152 = arith.mulf %149, %151 : vector<4x239xf32>
    %c32_71 = arith.constant 32 : index
    %c0_72 = arith.constant 0 : index
    %153 = vector.load %arg4[%c32_71, %c0_72] : memref<36x256xf32, #tpu.memory_space<vmem>>, vector<4x239xf32>
    tpu.vector_store %arg4[%c32_71, %c0_72], %152 {strides = array<i32>} : memref<36x256xf32, #tpu.memory_space<vmem>>, vector<4x239xf32>,
    %c2 = arith.constant 2 : index
    %c0_73 = arith.constant 0 : index
    %c0_74 = arith.constant 0 : index
    %154 = vector.load %arg2[%c2, %c0_73, %c0_74] : memref<3x8x36xf32, #tpu.memory_space<vmem>>, vector<1x8x36xf32>
    %155 = vector.shape_cast %154 : vector<1x8x36xf32> to vector<8x36xf32>
    %c0_75 = arith.constant 0 : index
    %c0_76 = arith.constant 0 : index
    %156 = vector.load %arg4[%c0_75, %c0_76] : memref<36x256xf32, #tpu.memory_space<vmem>>, vector<36x256xf32>
    %cst_77 = arith.constant dense<0.000000e+00> : vector<8x256xf32>
    %157 = tpu.matmul %155, %156, %cst_77 {dimension_numbers = #tpu.dot_dimension_numbers<[1], [0], [0], [1], [0, 0, 1, 1], [], []>} : vector<8x36xf32>, vector<36x256xf32>, vector<8x256xf32> -> vector<8x256xf32>
    %cst_78 = arith.constant 0.000000e+00 : f32
    %158 = vector.broadcast %cst_78 : f32 to vector<8x256xf32>
    %159 = arith.maximumf %157, %158 : vector<8x256xf32>
    %c2_79 = arith.constant 2 : index
    %c0_80 = arith.constant 0 : index
    %c0_81 = arith.constant 0 : index
    %c0_82 = arith.constant 0 : index
    %160 = vector.load %arg3[%c2_79, %c0_80, %c0_81, %c0_82] : memref<3x1x8x256xf32, #tpu.memory_space<vmem>>, vector<1x1x8x256xf32>
    %161 = vector.shape_cast %160 : vector<1x1x8x256xf32> to vector<8x256xf32>
    %162 = vector.shape_cast %159 : vector<8x256xf32> to vector<1x1x8x256xf32>
    tpu.vector_store %arg3[%c2_79, %c0_80, %c0_81, %c0_82], %162 {strides = array<i32>} : memref<3x1x8x256xf32, #tpu.memory_space<vmem>>, vector<1x1x8x256xf32>,
    return
  }
  func.func @transform_0(%arg0: i32) -> (i32, i32, i32) {
    %c0_i32 = arith.constant 0 : i32
    %c0_i32_0 = arith.constant 0 : i32
    %c0_i32_1 = arith.constant 0 : i32
    return %arg0, %c0_i32, %c0_i32_0 : i32, i32, i32
  }
  func.func @transform_1(%arg0: i32) -> (i32, i32, i32) {
    %c0_i32 = arith.constant 0 : i32
    %c0_i32_0 = arith.constant 0 : i32
    %c0_i32_1 = arith.constant 0 : i32
    %c0_i32_2 = arith.constant 0 : i32
    return %c0_i32, %c0_i32_0, %c0_i32_1 : i32, i32, i32
  }
  func.func @transform_2(%arg0: i32) -> (i32, i32, i32, i32) {
    %c0_i32 = arith.constant 0 : i32
    %c0_i32_0 = arith.constant 0 : i32
    %c0_i32_1 = arith.constant 0 : i32
    %c0_i32_2 = arith.constant 0 : i32
    return %c0_i32, %arg0, %c0_i32_0, %c0_i32_1 : i32, i32, i32, i32
  }
}

</mosaic_0001>

<llo_original>
// kernel: model_forward.1
$region0: #{model_forward.1}
  #allocation0 [shape = 'u32[]', space=smem, size = 0x4, offset = 0x4, fixed_abs, tag = 'smem constant byte address 0x4 - core index']
  #allocation1 [shape = 'u32[72,128]{1,0:T(1,128)}', space=vmem, size = 0x9000, scoped, tag = 'internal scratch']
  #allocation2 [shape = 'f32[36,256]{1,0:T(8,128)}', space=vmem, size = 0xa000, scoped, tag = 'scratch operand']
  %s0 = inlined_call_operand.vmem [shape: f32[2,4,256], index: 0, kind: input, shape index: {}]
  %s1 = inlined_call_operand.vmem [shape: f32[3,8,36], index: 1, kind: input, shape index: {}]
  %s2 = inlined_call_operand.vmem [shape: f32[3,2,8,256], index: 2, kind: output, shape index: {}]
  %s3 = sld [smem:[#allocation0]]
  $region60: #{model_forward.1} parent=0
    _
  %s5 = ssub.s32 1, %s3
  %s6 = scalar_select 0, %s5, %s3
  $region1: #{model_forward.1} parent=0
    #allocation3 [shape = 'u8[49152]{0}', space=vmem, size = 0xc000, scoped, tag = 'output window, operand 0']
    loop: start=0, step=1, limit=4
    $region2: #{model_forward.1} parent=1 // loop_pre_header
      _
    $region3: #{model_forward.1} parent=1 // loop_header
      %s8 = sphi 0, %s12
      %p9 = scmp.ge.s32.totalorder %s8, 4
      %s18 = sphi 0, %s20
      %s21 = sphi 0, %s18
      %s22 = sphi 0, %s21
      %s38 = sphi 0, %s22
      %s42 = sphi 0, %s42
      %s44 = sphi 0, %s42
      %s45 = sphi 0, %s44
      %s59 = sphi 0, %s45
      %s65 = sphi 0, %s67
      %s68 = sphi 0, %s65
      %s69 = sphi 0, %s68
      %s85 = sphi 0, %s69
    $region4: #{model_forward.1} parent=1 // loop_header_branch
      %11 = sbr.rel (%p9) target = $region8
    $region5: #{model_forward.1} parent=1 // loop_body
      %s13 = ssub.s32 %s8, 1
      %s14 = ssub.s32 %s8, 2
      %s15 = sadd.s32 %s8, 1
      %s16 = ssub.s32 %s8, %s15
      %p17 = scmp.eq.s32.totalorder %s16, 0
      %s19 = sadd.s32 %s18, 1
      %s20 = scalar_select %p17, %s18, %s19
      %p23 = pneg %p17
      %p24 = scmp.eq.s32.totalorder %s8, 1
      %p25 = por %p23, %p24
      %p26 = scmp.ne.s32.totalorder %s18, %s21
      %p27 = scmp.eq.s32.totalorder %s8, 0
      %p28 = por %p26, %p27
      %p29 = scmp.ne.s32.totalorder %s18, %s21
      %p30 = scmp.eq.s32.totalorder %s13, 1
      %p31 = por %p29, %p30
      %p32 = scmp.ne.s32.totalorder %s21, %s22
      %p33 = scmp.eq.s32.totalorder %s13, 0
      %p34 = por %p32, %p33
      %p35 = scmp.ne.s32.totalorder %s21, %s22
      %p36 = scmp.eq.s32.totalorder %s14, 1
      %p37 = por %p35, %p36
      %p39 = scmp.ne.s32.totalorder %s22, %s38
      %p40 = scmp.eq.s32.totalorder %s14, 0
      %p41 = por %p39, %p40
      %s43 = sadd.s32 %s42, 1
      %p46 = scmp.eq.s32.totalorder %s8, 1
      %p47 = scmp.ne.s32.totalorder %s42, %s44
      %p48 = scmp.eq.s32.totalorder %s8, 0
      %p49 = por %p47, %p48
      %p50 = scmp.ne.s32.totalorder %s42, %s44
      %p51 = scmp.eq.s32.totalorder %s13, 1
      %p52 = por %p50, %p51
      %p53 = scmp.ne.s32.totalorder %s44, %s45
      %p54 = scmp.eq.s32.totalorder %s13, 0
      %p55 = por %p53, %p54
      %p56 = scmp.ne.s32.totalorder %s44, %s45
      %p57 = scmp.eq.s32.totalorder %s14, 1
      %p58 = por %p56, %p57
      %p60 = scmp.ne.s32.totalorder %s45, %s59
      %p61 = scmp.eq.s32.totalorder %s14, 0
      %p62 = por %p60, %p61
      %s63 = ssub.s32 %s8, %s15
      %p64 = scmp.eq.s32.totalorder %s63, 0
      %s66 = sadd.s32 %s65, 1
      %s67 = scalar_select %p64, %s65, %s66
      %p70 = pneg %p64
      %p71 = scmp.eq.s32.totalorder %s8, 1
      %p72 = por %p70, %p71
      %p73 = scmp.ne.s32.totalorder %s65, %s68
      %p74 = scmp.eq.s32.totalorder %s8, 0
      %p75 = por %p73, %p74
      %p76 = scmp.ne.s32.totalorder %s65, %s68
      %p77 = scmp.eq.s32.totalorder %s13, 1
      %p78 = por %p76, %p77
      %p79 = scmp.ne.s32.totalorder %s68, %s69
      %p80 = scmp.eq.s32.totalorder %s13, 0
      %p81 = por %p79, %p80
      %p82 = scmp.ne.s32.totalorder %s68, %s69
      %p83 = scmp.eq.s32.totalorder %s14, 1
      %p84 = por %p82, %p83
      %p86 = scmp.ne.s32.totalorder %s69, %s85
      %p87 = scmp.eq.s32.totalorder %s14, 0
      %p88 = por %p86, %p87
      %p89 = scmp.le.s32.totalorder 1, %s8
      %p90 = scmp.lt.s32.totalorder %s8, 3
      %p91 = pnand %p89, %p90
      %p92 = pneg %p91
      // Predicated region
      $region9: #{model_forward.1} parent=5 // pred_check
        _
      $region10: #{model_forward.1} parent=5 // pred_check_branch
        %94 = sbr.rel (%p91) target = $region12
      $region11: #{model_forward.1} parent=5 // pred_region
        %s95 = ssub.s32 %s8, 1
        // Predicated region
        $region13: #{model_forward.1} parent=11 // pred_check
          %p96 = pneg %p55
        $region14: #{model_forward.1} parent=11 // pred_check_branch
          %98 = sbr.rel (%p96) target = $region16
        $region15: #{model_forward.1} parent=11 // pred_region
          _
        $region16: #{model_forward.1} parent=11 // pred_fallthru
          _
      $region12: #{model_forward.1} parent=5 // pred_fallthru
        _
      %p99 = scmp.lt.s32.totalorder %s8, 2
      // Predicated region
      $region17: #{model_forward.1} parent=5 // pred_check
        %p100 = pneg %p99
      $region18: #{model_forward.1} parent=5 // pred_check_branch
        %102 = sbr.rel (%p100) target = $region20
      $region19: #{model_forward.1} parent=5 // pred_region
        // Predicated region
        $region21: #{model_forward.1} parent=19 // pred_check
          %p103 = pneg %p28
        $region22: #{model_forward.1} parent=19 // pred_check_branch
          %105 = sbr.rel (%p103) target = $region24
        $region23: #{model_forward.1} parent=19 // pred_region
          %p106 = scmp.lt.s32.totalorder %s8, 1
          %s107 = scalar_select %p106, %s8, 1
          %s108 = smul.addr %s107, 2
          %s109 = smul.addr %s108, 4
          %s110 = scalar_lea.vmem %s0, %s109
        $region24: #{model_forward.1} parent=19 // pred_fallthru
          _
      $region20: #{model_forward.1} parent=5 // pred_fallthru
        _
      %p111 = scmp.le.s32.totalorder 1, %s8
      %p112 = scmp.lt.s32.totalorder %s8, 3
      %p113 = pnand %p111, %p112
      %p114 = pneg %p113
      // Predicated region
      $region25: #{model_forward.1} parent=5 // pred_check
        _
      $region26: #{model_forward.1} parent=5 // pred_check_branch
        %116 = sbr.rel (%p113) target = $region28
      $region27: #{model_forward.1} parent=5 // pred_region
        %s117 = ssub.s32 %s8, 1
        %p118 = scmp.lt.s32.totalorder %s13, 1
        %s119 = scalar_select %p118, %s13, 1
        %s120 = smul.addr %s119, 2
        %s121 = smul.addr %s120, 4
        %s122 = scalar_lea.vmem %s0, %s121
        %p123 = pneg %p34
        %p124 = pneg %p31
        %p125 = pneg %p55
        %p126 = pneg %p52
        %p127 = pneg %p81
        %p128 = pneg %p78
        %s129 = sand.u32 %s68, 1
        %s130 = sand.u32 %s68, 1
        %s131 = smul.addr %s130, 48
        %s132 = scalar_lea.vmem [#allocation3], %s131
        %p133 = scmp.lt.s32.totalorder %s13, 1
        %s134 = scalar_select %p133, %s13, 1
        %s135 = smul.addr %s134, 2
        %s136 = smul.addr %s135, 4
        %s137 = scalar_lea.vmem %s0, %s136
        %138 = vst [vmem:[#allocation2] sm:$0xff] 0.0
        %139 = vst [vmem:[#allocation2 + $0x8] sm:$0xff] 0.0
        %140 = vst [vmem:[#allocation2 + $0x10] sm:$0xff] 0.0
        %141 = vst [vmem:[#allocation2 + $0x18] sm:$0xff] 0.0
        %142 = vst [vmem:[#allocation2 + $0x20] sm:$0xff] 0.0
        %143 = vst [vmem:[#allocation2 + $0x28] sm:$0xff] 0.0
        %144 = vst [vmem:[#allocation2 + $0x30] sm:$0xff] 0.0
        %145 = vst [vmem:[#allocation2 + $0x38] sm:$0xff] 0.0
        %146 = vst [vmem:[#allocation2 + $0x40] sm:$0xf] 0.0
        %147 = vst [vmem:[#allocation2 + $0x48] sm:$0xf] 0.0
        %v148 = vlaneseq
        %v149 = vand.u32 %v148, 127
        %v150 = vadd.s32 %v149, 128
        %vm151 = vcmp.lt.s32.totalorder %v149, 0
        %v152 = vsub.s32 0, %v149
        %v153 = vsel %vm151, %v152, %v149
        %v154 = vshrl.u32 %v153, 4
        %v155 = vand.u32 %v153, 15
        %v156 = vsub.s32 0, %v155
        %v157 = vsel %vm151, %v156, %v155
        %vm158 = vcmp.lt.s32.totalorder %v150, 0
        %v159 = vsub.s32 0, %v150
        %v160 = vsel %vm158, %v159, %v150
        %v161 = vshrl.u32 %v160, 4
        %v162 = vand.u32 %v160, 15
        %v163 = vsub.s32 0, %v162
        %v164 = vsel %vm158, %v163, %v162
        %vm165 = vcmp.ne.s32.totalorder %v157, 0
        %vm166 = vcmp.ne.s32.totalorder %v164, 0
        %vm167 = vcmp.lt.s32.totalorder %v157, 0
        %vm168 = vcmp.lt.s32.totalorder %v164, 0
        %vm169 = vmand %vm167, %vm165
        %vm170 = vmand %vm168, %vm166
        %v171 = vadd.s32 %v157, 16
        %v172 = vadd.s32 %v164, 16
        %v173 = vsel %vm169, %v171, %v157
        %v174 = vsel %vm170, %v172, %v164
        %vm175 = vcmp.ne.s32.totalorder %v173, 0
        %vm176 = vcmp.ne.s32.totalorder %v174, 0
        %v177 = vsel %vm175, 1, 0
        %v178 = vsel %vm176, 1, 0
        %v179 = vcvt.s32.f32 %v177
        %v180 = vcvt.s32.f32 %v178
        %vm181 = vcmp.ne.s32.totalorder %v173, 15
        %vm182 = vcmp.ne.s32.totalorder %v174, 15
        %v183 = vsel %vm181, 1, 0
        %v184 = vsel %vm182, 1, 0
        %v185 = vcvt.s32.f32 %v183
        %v186 = vcvt.s32.f32 %v184
        %v187 = vld [vmem:[%s137] sm:$0xff]
        %v190 = vrot.slane %v180, 4
        %vm191 = vcmask 1043456
        %v192 = vsel %vm191, %v179, %v190
        %193 = vrot.lane.b32.xlu0 %v192, 111
        %v194 = vpop.permute.xlu0 %193
        %v195 = vrot.slane %v194, 4
        %vm196 = vcmask 908288
        %v197 = vsel %vm196, %v194, %v195
        %v199 = vmul.f32 %v187, %v197
        %201 = vst [vmem:[#allocation1] ss:$2 sm:$0xff] %v199
        %v202 = vld.sshfl [vmem:[#allocation1] sm:$0xff pattern:$0x75316420]
        %v203 = vld.sshfl [vmem:[#allocation1 + $0x8] sm:$0xff pattern:$0x75316420]
        %204 = vrot.lane.b32.xlu0 %v202, 17
        %v205 = vpop.permute.xlu0 %204
        %206 = vrot.lane.b32.xlu0 %v203, 17
        %v207 = vpop.permute.xlu0 %206
        %vm208 = vcmask 138240
        %v209 = vsel %vm208, %v205, %v207
        %vm212 = vcmask 1043592
        %213 = vst.msk [vmem:[#allocation2] sm:$0xf] %vm212, %v205
        %214 = vst [vmem:[#allocation2 + $0x8] sm:$0xf] %v209
        %s216 = scalar_lea.vmem [#allocation1], 1
        %217 = vst [vmem:[%s216] ss:$2 sm:$0xff] %v187
        %v218 = vld.sshfl [vmem:[#allocation1] sm:$0xff pattern:$0x75316420]
        %v219 = vld.sshfl [vmem:[#allocation1 + $0x8] sm:$0xff pattern:$0x75316420]
        %220 = vrot.lane.b32.xlu0 %v218, 16
        %v221 = vpop.permute.xlu0 %220
        %222 = vrot.lane.b32.xlu0 %v219, 16
        %v223 = vpop.permute.xlu0 %222
        %vm224 = vcmask 130048
        %v225 = vsel %vm224, %v221, %v223
        %vm228 = vcmask 1047684
        %229 = vst.msk [vmem:[#allocation2] sm:$0xf0] %vm228, %v221
        %230 = vst [vmem:[#allocation2 + $0x8] sm:$0xf0] %v225
        %v233 = vrot.slane %v186, 4
        %v234 = vsel %vm191, %v185, %v233
        %235 = vrot.lane.b32.xlu0 %v234, 113
        %v236 = vpop.permute.xlu0 %235
        %v237 = vrot.slane %v236, 4
        %vm238 = vcmask 924672
        %v239 = vsel %vm238, %v236, %v237
        %v241 = vmul.f32 %v187, %v239
        %243 = vst [vmem:[#allocation1] ss:$2 sm:$0xff] %v241
        %v244 = vld.sshfl [vmem:[#allocation1] sm:$0xff pattern:$0x75316420]
        %v245 = vld.sshfl [vmem:[#allocation1 + $0x8] sm:$0xff pattern:$0x75316420]
        %246 = vrot.lane.b32.xlu0 %v244, 15
        %v247 = vpop.permute.xlu0 %246
        %248 = vrot.lane.b32.xlu0 %v245, 15
        %v249 = vpop.permute.xlu0 %248
        %vm250 = vcmask 121856
        %v251 = vsel %vm250, %v247, %v249
        %vm254 = vcmask 1043576
        %255 = vst.msk [vmem:[#allocation2 + $0x10] sm:$0xf] %vm254, %v247
        %256 = vst [vmem:[#allocation2 + $0x18] sm:$0xf] %v251
        %257 = vrot.lane.b32.xlu0 %v192, 127
        %v258 = vpop.permute.xlu0 %257
        %v259 = vrot.slane %v258, 4
        %vm260 = vcmask 1039360
        %v261 = vsel %vm260, %v258, %v259
        %v263 = vmul.f32 %v187, %v261
        %s265 = scalar_lea.vmem [#allocation1], 1
        %266 = vst [vmem:[%s265] ss:$2 sm:$0xff] %v263
        %v267 = vld.sshfl [vmem:[#allocation1] sm:$0xff pattern:$0x75316420]
        %v268 = vld.sshfl [vmem:[#allocation1 + $0x8] sm:$0xff pattern:$0x75316420]
        %269 = vrot.lane.b32.xlu0 %v267, 1
        %v270 = vpop.permute.xlu0 %269
        %271 = vrot.lane.b32.xlu0 %v268, 1
        %v272 = vpop.permute.xlu0 %271
        %vm273 = vcmask 7168
        %v274 = vsel %vm273, %v270, %v272
        %vm277 = vcmask 1047564
        %278 = vst.msk [vmem:[#allocation2 + $0x10] sm:$0xf0] %vm277, %v270
        %279 = vst [vmem:[#allocation2 + $0x18] sm:$0xf0] %v274
        %280 = vst [vmem:[#allocation1] ss:$2 sm:$0xff] %v187
        %v281 = vld.sshfl [vmem:[#allocation1] sm:$0xff pattern:$0x75316420]
        %v282 = vld.sshfl [vmem:[#allocation1 + $0x8] sm:$0xff pattern:$0x75316420]
        %285 = vst [vmem:[#allocation2 + $0x20] sm:$0xf] %v281
        %286 = vst [vmem:[#allocation2 + $0x28] sm:$0xf] %v282
        %287 = vrot.lane.b32.xlu0 %v234, 1
        %v288 = vpop.permute.xlu0 %287
        %v289 = vrot.slane %v288, 4
        %v290 = vsel %vm273, %v289, %v288
        %v292 = vmul.f32 %v187, %v290
        %s294 = scalar_lea.vmem [#allocation1], 1
        %295 = vst [vmem:[%s294] ss:$2 sm:$0xff] %v292
        %v296 = vld.sshfl [vmem:[#allocation1] sm:$0xff pattern:$0x75316420]
        %v297 = vld.sshfl [vmem:[#allocation1 + $0x8] sm:$0xff pattern:$0x75316420]
        %298 = vrot.lane.b32.xlu0 %v296, 127
        %v299 = vpop.permute.xlu0 %298
        %300 = vrot.lane.b32.xlu0 %v297, 127
        %v301 = vpop.permute.xlu0 %300
        %v302 = vsel %vm260, %v299, %v301
        %305 = vst [vmem:[#allocation2 + $0x20] sm:$0xf0] %v302
        %vm306 = vcmask 1039364
        %307 = vst.msk [vmem:[#allocation2 + $0x28] sm:$0xf0] %vm306, %v301
        %308 = vrot.lane.b32.xlu0 %v192, 15
        %v309 = vpop.permute.xlu0 %308
        %v310 = vrot.slane %v309, 4
        %v311 = vsel %vm250, %v310, %v309
        %v313 = vmul.f32 %v187, %v311
        %315 = vst [vmem:[#allocation1] ss:$2 sm:$0xff] %v313
        %v316 = vld.sshfl [vmem:[#allocation1] sm:$0xff pattern:$0x75316420]
        %v317 = vld.sshfl [vmem:[#allocation1 + $0x8] sm:$0xff pattern:$0x75316420]
        %318 = vrot.lane.b32.xlu0 %v316, 113
        %v319 = vpop.permute.xlu0 %318
        %320 = vrot.lane.b32.xlu0 %v317, 113
        %v321 = vpop.permute.xlu0 %320
        %v322 = vsel %vm238, %v319, %v321
        %325 = vst [vmem:[#allocation2 + $0x30] sm:$0xf] %v322
        %vm326 = vcmask 920576
        %327 = vst.msk [vmem:[#allocation2 + $0x38] sm:$0xf] %vm326, %v321
        %s328 = scalar_lea.vmem [#allocation1], 1
        %329 = vst [vmem:[%s328] ss:$2 sm:$0xff] %v187
        %v330 = vld.sshfl [vmem:[#allocation1] sm:$0xff pattern:$0x75316420]
        %v331 = vld.sshfl [vmem:[#allocation1 + $0x8] sm:$0xff pattern:$0x75316420]
        %332 = vrot.lane.b32.xlu0 %v330, 112
        %v333 = vpop.permute.xlu0 %332
        %334 = vrot.lane.b32.xlu0 %v331, 112
        %v335 = vpop.permute.xlu0 %334
        %vm336 = vcmask 916480
        %v337 = vsel %vm336, %v333, %v335
        %340 = vst [vmem:[#allocation2 + $0x30] sm:$0xf0] %v337
        %vm341 = vcmask 916484
        %342 = vst.msk [vmem:[#allocation2 + $0x38] sm:$0xf0] %vm341, %v335
        %343 = vrot.lane.b32.xlu0 %v234, 17
        %v344 = vpop.permute.xlu0 %343
        %v345 = vrot.slane %v344, 4
        %v346 = vsel %vm208, %v345, %v344
        %v348 = vmul.f32 %v187, %v346
        %350 = vst [vmem:[#allocation1] ss:$2 sm:$0xff] %v348
        %v351 = vld.sshfl [vmem:[#allocation1] sm:$0xff pattern:$0x75316420]
        %v352 = vld.sshfl [vmem:[#allocation1 + $0x8] sm:$0xff pattern:$0x75316420]
        %353 = vrot.lane.b32.xlu0 %v351, 111
        %v354 = vpop.permute.xlu0 %353
        %355 = vrot.lane.b32.xlu0 %v352, 111
        %v356 = vpop.permute.xlu0 %355
        %v357 = vsel %vm196, %v354, %v356
        %360 = vst [vmem:[#allocation2 + $0x40] sm:$0xf] %v357
        %vm361 = vcmask 904192
        %362 = vst.msk [vmem:[#allocation2 + $0x48] sm:$0xf] %vm361, %v356
        %v363 = vld [vmem:[%s1] sm:$0xff]
        %v364 = vld [vmem:[#allocation2] sm:$0xff]
        %v365 = vld [vmem:[#allocation2 + $0x8] sm:$0xff]
        %v366 = vld [vmem:[#allocation2 + $0x10] sm:$0xff]
        %v367 = vld [vmem:[#allocation2 + $0x18] sm:$0xff]
        %v368 = vld [vmem:[#allocation2 + $0x20] sm:$0xff]
        %v369 = vld [vmem:[#allocation2 + $0x28] sm:$0xff]
        %v370 = vld [vmem:[#allocation2 + $0x30] sm:$0xff]
        %v371 = vld [vmem:[#allocation2 + $0x38] sm:$0xff]
        %v372 = vld [vmem:[#allocation2 + $0x40] sm:$0xf]
        %v373 = vld [vmem:[#allocation2 + $0x48] sm:$0xf]
        %vm374 = vcmask 293888
        %v376 = vsel %vm374, %v363, 0
        %v379 = vsel %vm191, %v372, 0
        %v382 = vsel %vm191, %v373, 0
        %384 = vmatpush.msra.mxu0 0.0
        %385 = vmatpush.msra.mxu0 0.0
        %386 = vmatpush.msra.mxu0 0.0
        %387 = vmatpush.msra.mxu0 0.0
        %388 = vmatpush.msra.mxu0 0.0
        %389 = vmatpush.msra.mxu0 0.0
        %390 = vmatpush.msra.mxu0 0.0
        %391 = vmatpush.msra.mxu0 0.0
        %392 = vmatpush.msra.mxu0 0.0
        %393 = vmatpush.msra.mxu0 0.0
        %394 = vmatpush.msra.mxu0 0.0
        %395 = vmatpush.msra.mxu0 %v379
        %396 = vmatpush.msra.mxu0 %v370
        %397 = vmatpush.msra.mxu0 %v368
        %398 = vmatpush.msra.mxu0 %v366
        %399 = vmatpush.msra.mxu0 %v364
        %400 = vmatmul.f32.gmra.mxu0 %v376
        %v401 = vpop.f32.mrf.mxu0
        %v402 = vadd.f32 0.0, %v401
        %403 = vdwg.mxu0
        %404 = vmatpush.msra.mxu0 0.0
        %405 = vmatpush.msra.mxu0 0.0
        %406 = vmatpush.msra.mxu0 0.0
        %407 = vmatpush.msra.mxu0 0.0
        %408 = vmatpush.msra.mxu0 0.0
        %409 = vmatpush.msra.mxu0 0.0
        %410 = vmatpush.msra.mxu0 0.0
        %411 = vmatpush.msra.mxu0 0.0
        %412 = vmatpush.msra.mxu0 0.0
        %413 = vmatpush.msra.mxu0 0.0
        %414 = vmatpush.msra.mxu0 0.0
        %415 = vmatpush.msra.mxu0 %v382
        %416 = vmatpush.msra.mxu0 %v371
        %417 = vmatpush.msra.mxu0 %v369
        %418 = vmatpush.msra.mxu0 %v367
        %419 = vmatpush.msra.mxu0 %v365
        %420 = vmatmul.f32.gmra.mxu0 %v376
        %v421 = vpop.f32.mrf.mxu0
        %v422 = vadd.f32 0.0, %v421
        %423 = vdwg.mxu0
        %v424 = vmax.f32 %v402, 0.0
        %v425 = vmax.f32 %v422, 0.0
        %426 = vst [vmem:[%s132] sm:$0xff] %v424
        %427 = vst [vmem:[%s132 + $0x8] sm:$0xff] %v425
        %428 = vrot.lane.b32.xlu0 %v179, 111
        %v429 = vpop.permute.xlu0 %428
        %430 = vrot.lane.b32.xlu0 %v180, 111
        %v431 = vpop.permute.xlu0 %430
        %v432 = vsel %vm196, %v429, %v431
        %v435 = vmul.f32 %v424, %v432
        %v436 = vmul.f32 %v425, %v431
        %439 = vrot.lane.b32.xlu0 %v435, 17
        %v440 = vpop.permute.xlu0 %439
        %441 = vrot.lane.b32.xlu0 %v436, 17
        %v442 = vpop.permute.xlu0 %441
        %v443 = vsel %vm208, %v440, %v442
        %446 = vst.msk [vmem:[#allocation2] sm:$0xf] %vm212, %v440
        %447 = vst [vmem:[#allocation2 + $0x8] sm:$0xf] %v443
        %v450 = vrot.slane %v424, 4
        %v451 = vrot.slane %v425, 4
        %452 = vrot.lane.b32.xlu0 %v450, 16
        %v453 = vpop.permute.xlu0 %452
        %454 = vrot.lane.b32.xlu0 %v451, 16
        %v455 = vpop.permute.xlu0 %454
        %v456 = vsel %vm224, %v453, %v455
        %459 = vst.msk [vmem:[#allocation2] sm:$0xf0] %vm228, %v453
        %460 = vst [vmem:[#allocation2 + $0x8] sm:$0xf0] %v456
        %461 = vrot.lane.b32.xlu0 %v185, 113
        %v462 = vpop.permute.xlu0 %461
        %463 = vrot.lane.b32.xlu0 %v186, 113
        %v464 = vpop.permute.xlu0 %463
        %v465 = vsel %vm238, %v462, %v464
        %v468 = vmul.f32 %v424, %v465
        %v469 = vmul.f32 %v425, %v464
        %472 = vrot.lane.b32.xlu0 %v468, 15
        %v473 = vpop.permute.xlu0 %472
        %474 = vrot.lane.b32.xlu0 %v469, 15
        %v475 = vpop.permute.xlu0 %474
        %v476 = vsel %vm250, %v473, %v475
        %479 = vst.msk [vmem:[#allocation2 + $0x10] sm:$0xf] %vm254, %v473
        %480 = vst [vmem:[#allocation2 + $0x18] sm:$0xf] %v476
        %481 = vrot.lane.b32.xlu0 %v179, 127
        %v482 = vpop.permute.xlu0 %481
        %483 = vrot.lane.b32.xlu0 %v180, 127
        %v484 = vpop.permute.xlu0 %483
        %v485 = vsel %vm260, %v482, %v484
        %v488 = vmul.f32 %v424, %v485
        %v489 = vmul.f32 %v425, %v484
        %v492 = vrot.slane %v488, 4
        %v493 = vrot.slane %v489, 4
        %494 = vrot.lane.b32.xlu0 %v492, 1
        %v495 = vpop.permute.xlu0 %494
        %496 = vrot.lane.b32.xlu0 %v493, 1
        %v497 = vpop.permute.xlu0 %496
        %v498 = vsel %vm273, %v495, %v497
        %501 = vst.msk [vmem:[#allocation2 + $0x10] sm:$0xf0] %vm277, %v495
        %502 = vst [vmem:[#allocation2 + $0x18] sm:$0xf0] %v498
        %503 = vst [vmem:[#allocation2 + $0x20] sm:$0xf] %v424
        %504 = vst [vmem:[#allocation2 + $0x28] sm:$0xf] %v425
        %505 = vrot.lane.b32.xlu0 %v185, 1
        %v506 = vpop.permute.xlu0 %505
        %507 = vrot.lane.b32.xlu0 %v186, 1
        %v508 = vpop.permute.xlu0 %507
        %v509 = vsel %vm273, %v506, %v508
        %v512 = vmul.f32 %v424, %v506
        %v513 = vmul.f32 %v425, %v509
        %v516 = vrot.slane %v512, 4
        %v517 = vrot.slane %v513, 4
        %518 = vrot.lane.b32.xlu0 %v516, 127
        %v519 = vpop.permute.xlu0 %518
        %520 = vrot.lane.b32.xlu0 %v517, 127
        %v521 = vpop.permute.xlu0 %520
        %v522 = vsel %vm260, %v519, %v521
        %525 = vst [vmem:[#allocation2 + $0x20] sm:$0xf0] %v522
        %526 = vst.msk [vmem:[#allocation2 + $0x28] sm:$0xf0] %vm306, %v521
        %527 = vrot.lane.b32.xlu0 %v179, 15
        %v528 = vpop.permute.xlu0 %527
        %529 = vrot.lane.b32.xlu0 %v180, 15
        %v530 = vpop.permute.xlu0 %529
        %v531 = vsel %vm250, %v528, %v530
        %v534 = vmul.f32 %v424, %v528
        %v535 = vmul.f32 %v425, %v531
        %538 = vrot.lane.b32.xlu0 %v534, 113
        %v539 = vpop.permute.xlu0 %538
        %540 = vrot.lane.b32.xlu0 %v535, 113
        %v541 = vpop.permute.xlu0 %540
        %v542 = vsel %vm238, %v539, %v541
        %545 = vst [vmem:[#allocation2 + $0x30] sm:$0xf] %v542
        %546 = vst.msk [vmem:[#allocation2 + $0x38] sm:$0xf] %vm326, %v541
        %547 = vrot.lane.b32.xlu0 %v450, 112
        %v548 = vpop.permute.xlu0 %547
        %549 = vrot.lane.b32.xlu0 %v451, 112
        %v550 = vpop.permute.xlu0 %549
        %v551 = vsel %vm336, %v548, %v550
        %554 = vst [vmem:[#allocation2 + $0x30] sm:$0xf0] %v551
        %555 = vst.msk [vmem:[#allocation2 + $0x38] sm:$0xf0] %vm341, %v550
        %556 = vrot.lane.b32.xlu0 %v185, 17
        %v557 = vpop.permute.xlu0 %556
        %558 = vrot.lane.b32.xlu0 %v186, 17
        %v559 = vpop.permute.xlu0 %558
        %v560 = vsel %vm208, %v557, %v559
        %v563 = vmul.f32 %v424, %v557
        %v564 = vmul.f32 %v425, %v560
        %567 = vrot.lane.b32.xlu0 %v563, 111
        %v568 = vpop.permute.xlu0 %567
        %569 = vrot.lane.b32.xlu0 %v564, 111
        %v570 = vpop.permute.xlu0 %569
        %v571 = vsel %vm196, %v568, %v570
        %574 = vst [vmem:[#allocation2 + $0x40] sm:$0xf] %v571
        %575 = vst.msk [vmem:[#allocation2 + $0x48] sm:$0xf] %vm361, %v570
        %s576 = scalar_lea.vmem %s1, 8
        %v577 = vld [vmem:[%s576] sm:$0xff]
        %v578 = vld [vmem:[#allocation2] sm:$0xff]
        %v579 = vld [vmem:[#allocation2 + $0x8] sm:$0xff]
        %v580 = vld [vmem:[#allocation2 + $0x10] sm:$0xff]
        %v581 = vld [vmem:[#allocation2 + $0x18] sm:$0xff]
        %v582 = vld [vmem:[#allocation2 + $0x20] sm:$0xff]
        %v583 = vld [vmem:[#allocation2 + $0x28] sm:$0xff]
        %v584 = vld [vmem:[#allocation2 + $0x30] sm:$0xff]
        %v585 = vld [vmem:[#allocation2 + $0x38] sm:$0xff]
        %v586 = vld [vmem:[#allocation2 + $0x40] sm:$0xf]
        %v587 = vld [vmem:[#allocation2 + $0x48] sm:$0xf]
        %v589 = vsel %vm374, %v577, 0
        %v592 = vsel %vm191, %v586, 0
        %v595 = vsel %vm191, %v587, 0
        %597 = vmatpush.msra.mxu0 0.0
        %598 = vmatpush.msra.mxu0 0.0
        %599 = vmatpush.msra.mxu0 0.0
        %600 = vmatpush.msra.mxu0 0.0
        %601 = vmatpush.msra.mxu0 0.0
        %602 = vmatpush.msra.mxu0 0.0
        %603 = vmatpush.msra.mxu0 0.0
        %604 = vmatpush.msra.mxu0 0.0
        %605 = vmatpush.msra.mxu0 0.0
        %606 = vmatpush.msra.mxu0 0.0
        %607 = vmatpush.msra.mxu0 0.0
        %608 = vmatpush.msra.mxu0 %v592
        %609 = vmatpush.msra.mxu0 %v584
        %610 = vmatpush.msra.mxu0 %v582
        %611 = vmatpush.msra.mxu0 %v580
        %612 = vmatpush.msra.mxu0 %v578
        %613 = vmatmul.f32.gmra.mxu0 %v589
        %v614 = vpop.f32.mrf.mxu0
        %v615 = vadd.f32 0.0, %v614
        %616 = vdwg.mxu0
        %617 = vmatpush.msra.mxu0 0.0
        %618 = vmatpush.msra.mxu0 0.0
        %619 = vmatpush.msra.mxu0 0.0
        %620 = vmatpush.msra.mxu0 0.0
        %621 = vmatpush.msra.mxu0 0.0
        %622 = vmatpush.msra.mxu0 0.0
        %623 = vmatpush.msra.mxu0 0.0
        %624 = vmatpush.msra.mxu0 0.0
        %625 = vmatpush.msra.mxu0 0.0
        %626 = vmatpush.msra.mxu0 0.0
        %627 = vmatpush.msra.mxu0 0.0
        %628 = vmatpush.msra.mxu0 %v595
        %629 = vmatpush.msra.mxu0 %v585
        %630 = vmatpush.msra.mxu0 %v583
        %631 = vmatpush.msra.mxu0 %v581
        %632 = vmatpush.msra.mxu0 %v579
        %633 = vmatmul.f32.gmra.mxu0 %v589
        %v634 = vpop.f32.mrf.mxu0
        %v635 = vadd.f32 0.0, %v634
        %636 = vdwg.mxu0
        %v637 = vmax.f32 %v615, 0.0
        %v638 = vmax.f32 %v635, 0.0
        %s639 = scalar_lea.vmem %s132, 16 [#allocation3]
        %640 = vst [vmem:[%s639] sm:$0xff] %v637
        %641 = vst [vmem:[%s639 + $0x8] sm:$0xff] %v638
        %v642 = vmul.f32 %v637, %v432
        %v643 = vmul.f32 %v638, %v431
        %646 = vrot.lane.b32.xlu0 %v642, 17
        %v647 = vpop.permute.xlu0 %646
        %648 = vrot.lane.b32.xlu0 %v643, 17
        %v649 = vpop.permute.xlu0 %648
        %v650 = vsel %vm208, %v647, %v649
        %653 = vst.msk [vmem:[#allocation2] sm:$0xf] %vm212, %v647
        %654 = vst [vmem:[#allocation2 + $0x8] sm:$0xf] %v650
        %v657 = vrot.slane %v637, 4
        %v658 = vrot.slane %v638, 4
        %659 = vrot.lane.b32.xlu0 %v657, 16
        %v660 = vpop.permute.xlu0 %659
        %661 = vrot.lane.b32.xlu0 %v658, 16
        %v662 = vpop.permute.xlu0 %661
        %v663 = vsel %vm224, %v660, %v662
        %666 = vst.msk [vmem:[#allocation2] sm:$0xf0] %vm228, %v660
        %667 = vst [vmem:[#allocation2 + $0x8] sm:$0xf0] %v663
        %v668 = vmul.f32 %v637, %v465
        %v669 = vmul.f32 %v638, %v464
        %672 = vrot.lane.b32.xlu0 %v668, 15
        %v673 = vpop.permute.xlu0 %672
        %674 = vrot.lane.b32.xlu0 %v669, 15
        %v675 = vpop.permute.xlu0 %674
        %v676 = vsel %vm250, %v673, %v675
        %679 = vst.msk [vmem:[#allocation2 + $0x10] sm:$0xf] %vm254, %v673
        %680 = vst [vmem:[#allocation2 + $0x18] sm:$0xf] %v676
        %v681 = vmul.f32 %v637, %v485
        %v682 = vmul.f32 %v638, %v484
        %v685 = vrot.slane %v681, 4
        %v686 = vrot.slane %v682, 4
        %687 = vrot.lane.b32.xlu0 %v685, 1
        %v688 = vpop.permute.xlu0 %687
        %689 = vrot.lane.b32.xlu0 %v686, 1
        %v690 = vpop.permute.xlu0 %689
        %v691 = vsel %vm273, %v688, %v690
        %694 = vst.msk [vmem:[#allocation2 + $0x10] sm:$0xf0] %vm277, %v688
        %695 = vst [vmem:[#allocation2 + $0x18] sm:$0xf0] %v691
        %696 = vst [vmem:[#allocation2 + $0x20] sm:$0xf] %v637
        %697 = vst [vmem:[#allocation2 + $0x28] sm:$0xf] %v638
        %v698 = vmul.f32 %v637, %v506
        %v699 = vmul.f32 %v638, %v509
        %v702 = vrot.slane %v698, 4
        %v703 = vrot.slane %v699, 4
        %704 = vrot.lane.b32.xlu0 %v702, 127
        %v705 = vpop.permute.xlu0 %704
        %706 = vrot.lane.b32.xlu0 %v703, 127
        %v707 = vpop.permute.xlu0 %706
        %v708 = vsel %vm260, %v705, %v707
        %711 = vst [vmem:[#allocation2 + $0x20] sm:$0xf0] %v708
        %712 = vst.msk [vmem:[#allocation2 + $0x28] sm:$0xf0] %vm306, %v707
        %v713 = vmul.f32 %v637, %v528
        %v714 = vmul.f32 %v638, %v531
        %717 = vrot.lane.b32.xlu0 %v713, 113
        %v718 = vpop.permute.xlu0 %717
        %719 = vrot.lane.b32.xlu0 %v714, 113
        %v720 = vpop.permute.xlu0 %719
        %v721 = vsel %vm238, %v718, %v720
        %724 = vst [vmem:[#allocation2 + $0x30] sm:$0xf] %v721
        %725 = vst.msk [vmem:[#allocation2 + $0x38] sm:$0xf] %vm326, %v720
        %726 = vrot.lane.b32.xlu0 %v657, 112
        %v727 = vpop.permute.xlu0 %726
        %728 = vrot.lane.b32.xlu0 %v658, 112
        %v729 = vpop.permute.xlu0 %728
        %v730 = vsel %vm336, %v727, %v729
        %733 = vst [vmem:[#allocation2 + $0x30] sm:$0xf0] %v730
        %734 = vst.msk [vmem:[#allocation2 + $0x38] sm:$0xf0] %vm341, %v729
        %v735 = vmul.f32 %v637, %v557
        %v736 = vmul.f32 %v638, %v560
        %739 = vrot.lane.b32.xlu0 %v735, 111
        %v740 = vpop.permute.xlu0 %739
        %741 = vrot.lane.b32.xlu0 %v736, 111
        %v742 = vpop.permute.xlu0 %741
        %v743 = vsel %vm196, %v740, %v742
        %746 = vst [vmem:[#allocation2 + $0x40] sm:$0xf] %v743
        %747 = vst.msk [vmem:[#allocation2 + $0x48] sm:$0xf] %vm361, %v742
        %s748 = scalar_lea.vmem %s1, 16
        %v749 = vld [vmem:[%s748] sm:$0xff]
        %v750 = vld [vmem:[#allocation2] sm:$0xff]
        %v751 = vld [vmem:[#allocation2 + $0x8] sm:$0xff]
        %v752 = vld [vmem:[#allocation2 + $0x10] sm:$0xff]
        %v753 = vld [vmem:[#allocation2 + $0x18] sm:$0xff]
        %v754 = vld [vmem:[#allocation2 + $0x20] sm:$0xff]
        %v755 = vld [vmem:[#allocation2 + $0x28] sm:$0xff]
        %v756 = vld [vmem:[#allocation2 + $0x30] sm:$0xff]
        %v757 = vld [vmem:[#allocation2 + $0x38] sm:$0xff]
        %v758 = vld [vmem:[#allocation2 + $0x40] sm:$0xf]
        %v759 = vld [vmem:[#allocation2 + $0x48] sm:$0xf]
        %v761 = vsel %vm374, %v749, 0
        %v764 = vsel %vm191, %v758, 0
        %v767 = vsel %vm191, %v759, 0
        %769 = vmatpush.msra.mxu0 0.0
        %770 = vmatpush.msra.mxu0 0.0
        %771 = vmatpush.msra.mxu0 0.0
        %772 = vmatpush.msra.mxu0 0.0
        %773 = vmatpush.msra.mxu0 0.0
        %774 = vmatpush.msra.mxu0 0.0
        %775 = vmatpush.msra.mxu0 0.0
        %776 = vmatpush.msra.mxu0 0.0
        %777 = vmatpush.msra.mxu0 0.0
        %778 = vmatpush.msra.mxu0 0.0
        %779 = vmatpush.msra.mxu0 0.0
        %780 = vmatpush.msra.mxu0 %v764
        %781 = vmatpush.msra.mxu0 %v756
        %782 = vmatpush.msra.mxu0 %v754
        %783 = vmatpush.msra.mxu0 %v752
        %784 = vmatpush.msra.mxu0 %v750
        %785 = vmatmul.f32.gmra.mxu0 %v761
        %v786 = vpop.f32.mrf.mxu0
        %v787 = vadd.f32 0.0, %v786
        %788 = vdwg.mxu0
        %789 = vmatpush.msra.mxu0 0.0
        %790 = vmatpush.msra.mxu0 0.0
        %791 = vmatpush.msra.mxu0 0.0
        %792 = vmatpush.msra.mxu0 0.0
        %793 = vmatpush.msra.mxu0 0.0
        %794 = vmatpush.msra.mxu0 0.0
        %795 = vmatpush.msra.mxu0 0.0
        %796 = vmatpush.msra.mxu0 0.0
        %797 = vmatpush.msra.mxu0 0.0
        %798 = vmatpush.msra.mxu0 0.0
        %799 = vmatpush.msra.mxu0 0.0
        %800 = vmatpush.msra.mxu0 %v767
        %801 = vmatpush.msra.mxu0 %v757
        %802 = vmatpush.msra.mxu0 %v755
        %803 = vmatpush.msra.mxu0 %v753
        %804 = vmatpush.msra.mxu0 %v751
        %805 = vmatmul.f32.gmra.mxu0 %v761
        %v806 = vpop.f32.mrf.mxu0
        %v807 = vadd.f32 0.0, %v806
        %808 = vdwg.mxu0
        %v809 = vmax.f32 %v787, 0.0
        %v810 = vmax.f32 %v807, 0.0
        %s811 = scalar_lea.vmem %s132, 32 [#allocation3]
        %812 = vst [vmem:[%s811] sm:$0xff] %v809
        %813 = vst [vmem:[%s811 + $0x8] sm:$0xff] %v810
        %s814 = sand.u32 %s68, 1
        %s815 = sand.u32 %s68, 1
        %s816 = smul.addr %s815, 48
        %s817 = scalar_lea.vmem [#allocation3], %s816
        // Predicated region
        $region29: #{model_forward.1} parent=27 // pred_check
          %p818 = pneg %p78
        $region30: #{model_forward.1} parent=27 // pred_check_branch
          %820 = sbr.rel (%p818) target = $region32
        $region31: #{model_forward.1} parent=27 // pred_region
          %s821 = smul.addr %s13, 2
          %s822 = smul.addr %s821, 8
          %s823 = scalar_lea.vmem %s2, %s822
          // Predicated region
          $region33: #{model_forward.1} parent=31 // pred_check
            _
          $region34: #{model_forward.1} parent=31 // pred_check_branch
            %825 = sbr.rel (0) target = $region36
          $region35: #{model_forward.1} parent=31 // pred_region
            // Predicated region
            $region37: #{model_forward.1} parent=35 // pred_check
              _
            $region38: #{model_forward.1} parent=35 // pred_check_branch
              %827 = sbr.rel (0) target = $region40
            $region39: #{model_forward.1} parent=35 // pred_region
              loop: start=0, step=1, limit=1
              $region41: #{model_forward.1} parent=39 // loop_pre_header
                _
              $region42: #{model_forward.1} parent=39 // loop_header
                %s829 = sphi 0, %s833
                %p830 = scmp.ge.s32.totalorder %s829, 1
                %s834 = sphi %s817, %s817
                %s835 = sphi %s823, %s823
              $region43: #{model_forward.1} parent=39 // loop_header_branch
                %832 = sbr.rel (%p830) target = $region47
              $region44: #{model_forward.1} parent=39 // loop_body
                %v836 = vld [vmem:[%s834] sm:$0xff]
                %837 = vst [vmem:[%s835] sm:$0xff] %v836
                %v838 = vld [vmem:[%s834 + $0x8] sm:$0xff]
                %839 = vst [vmem:[%s835 + $0x8] sm:$0xff] %v838
                %v840 = vld [vmem:[%s834 + $0x10] sm:$0xff]
                %841 = vst [vmem:[%s835 + $0x20] sm:$0xff] %v840
                %v842 = vld [vmem:[%s834 + $0x18] sm:$0xff]
                %843 = vst [vmem:[%s835 + $0x28] sm:$0xff] %v842
                %v844 = vld [vmem:[%s834 + $0x20] sm:$0xff]
                %845 = vst [vmem:[%s835 + $0x40] sm:$0xff] %v844
                %v846 = vld [vmem:[%s834 + $0x28] sm:$0xff]
                %847 = vst [vmem:[%s835 + $0x48] sm:$0xff] %v846
              $region45: #{model_forward.1} parent=39 // loop_footer
                %s833 = sadd.s32 1, %s829
              $region46: #{model_forward.1} parent=39 // loop_footer_branch
                %828 = sbr.rel target = $region42
              $region47: #{model_forward.1} parent=39 // loop_exit
                _
            $region40: #{model_forward.1} parent=35 // pred_fallthru
              _
            // Predicated region
            $region48: #{model_forward.1} parent=35 // pred_check
              _
            $region49: #{model_forward.1} parent=35 // pred_check_branch
              %849 = sbr.rel target = $region51
            $region50: #{model_forward.1} parent=35 // pred_region
              _
            $region51: #{model_forward.1} parent=35 // pred_fallthru
              _
          $region36: #{model_forward.1} parent=31 // pred_fallthru
            _
          %850 = vnop
        $region32: #{model_forward.1} parent=27 // pred_fallthru
          _
      $region28: #{model_forward.1} parent=5 // pred_fallthru
        _
      %p851 = scmp.le.s32.totalorder 2, %s8
      // Predicated region
      $region52: #{model_forward.1} parent=5 // pred_check
        %p852 = pneg %p851
      $region53: #{model_forward.1} parent=5 // pred_check_branch
        %854 = sbr.rel (%p852) target = $region55
      $region54: #{model_forward.1} parent=5 // pred_region
        %s855 = ssub.s32 %s8, 2
        // Predicated region
        $region56: #{model_forward.1} parent=54 // pred_check
          %p856 = pneg %p84
        $region57: #{model_forward.1} parent=54 // pred_check_branch
          %858 = sbr.rel (%p856) target = $region59
        $region58: #{model_forward.1} parent=54 // pred_region
          %s859 = sand.u32 %s69, 1
          %s860 = sand.u32 %s69, 1
          %s861 = smul.addr %s860, 48
          %s862 = scalar_lea.vmem [#allocation3], %s861
        $region59: #{model_forward.1} parent=54 // pred_fallthru
          _
      $region55: #{model_forward.1} parent=5 // pred_fallthru
        _
    $region6: #{model_forward.1} parent=1 // loop_footer
      %s12 = sadd.s32 1, %s8
    $region7: #{model_forward.1} parent=1 // loop_footer_branch
      %7 = sbr.rel target = $region3
    $region8: #{model_forward.1} parent=1 // loop_exit
      _

</llo_original>
